<compile_context>
chip_gen: v5e
topology: v5e:2x2
jax: 0.10.0
libtpu: 0.0.40
codegen_flags: <defaults>
</compile_context>

<pallas_src>
import jax
import jax.numpy as jnp
from jax.experimental import pallas as pl
from jax.experimental.pallas import tpu as pltpu

HIDDEN_DIM = 32   # config.hidden_dim
N_LAYERS = 2      # config.n_layers
IN_DIM = 2
OUT_DIM = 1

# Cap on the batch-tile (lane) width: (H, tb) f32 activations at tb=32768 are ~4 MiB,
# comfortably inside v7x's 32 MiB scoped-VMEM default (and trivially inside v5e/v6e).
_TB_CAP = 32768
_LANES = 128


def _mlp_kernel(s_ref, w0_ref, b0_ref, w1_ref, b1_ref, w2_ref, b2_ref, o_ref):
    # Shapes inside the kernel (feature-major, batch on lanes):
    #   s_ref: (2, tb)   w0: (H, 2)  b0: (H, 1)
    #   w1: (H, H)       b1: (H, 1)
    #   w2: (1, H)       b2: (1, 1)  o_ref: (1, tb)
    s = s_ref[...]

    # Layer 0: K=2 contraction as two VPU broadcast FMAs (outer products) —
    # avoids wasting a full MXU pass on a depth-2 contraction.
    h = (w0_ref[:, 0:1] * s[0:1, :]
         + w0_ref[:, 1:2] * s[1:2, :]
         + b0_ref[...])
    h = jnp.maximum(h, 0.0)                                   # (H, tb)

    # Layer 1: (H, H) @ (H, tb) on the MXU.
    h = jnp.dot(w1_ref[...], h, preferred_element_type=jnp.float32) + b1_ref[...]
    h = jnp.maximum(h, 0.0)                                   # (H, tb)

    # TODO(synk): dropout omitted (inference/eval semantics -> identity).

    # Output layer: (1, H) @ (H, tb) -> (1, tb), lane-dense along batch.
    o = jnp.dot(w2_ref[...], h, preferred_element_type=jnp.float32) + b2_ref[...]
    o_ref[...] = o.astype(o_ref.dtype)


def _pick_tb(b_pad):
    """Pick the batch tile (lane width) for a lane-aligned padded batch.

    - Small/medium batches: one tile (grid=(1,)) — no per-step overhead on 1-TC chips.
    - Large batches: >=2 tiles, each a multiple of 128 lanes, capped so activations
      stay well under the v7x 32 MiB scoped-VMEM default; multiple "parallel" grid
      steps let v7x's two TensorCores split the batch.
    """
    if b_pad <= 1024:
        return b_pad
    tb = min(_TB_CAP, b_pad // 2)
    tb = max(_LANES, (tb // _LANES) * _LANES)
    while b_pad % tb != 0:
        tb -= _LANES
    return tb


def manager_baseline_forward(s, z, params, *, tb=None):
    """Pallas forward of ManagerBaseline.forward(s, z). `z` is unused (as in PyTorch).

    s: (B, 2) float32. Returns (B, 1) float32.
    params: PyTorch-layout (W: (out, in), b: (out, 1)) for the three Linear layers.
    """
    del z
    w0, b0, w1, b1, w2, b2 = params
    B = s.shape[0]
    H = w0.shape[0]

    # Batch onto the 128-lane axis: (B, 2) -> (2, B). Cheap XLA transpose outside the
    # kernel; makes every kernel load/store lane-dense. Pad batch to a lane multiple
    # so stores are unmasked full-vreg vst (padding sliced off below).
    s_t = s.T
    b_pad = max(_LANES, ((B + _LANES - 1) // _LANES) * _LANES)
    if b_pad != B:
        s_t = jnp.pad(s_t, ((0, 0), (0, b_pad - B)))

    if tb is None:
        tb = _pick_tb(b_pad)
    assert b_pad % tb == 0, (b_pad, tb)
    grid = (b_pad // tb,)

    invariant = lambda shape: pl.BlockSpec(shape, lambda i: (0, 0))

    out_t = pl.pallas_call(
        _mlp_kernel,
        out_shape=jax.ShapeDtypeStruct((OUT_DIM, b_pad), jnp.float32),
        grid_spec=pl.GridSpec(
            grid=grid,
            in_specs=[
                pl.BlockSpec((IN_DIM, tb), lambda i: (0, i)),  # s tile (2, tb)
                invariant((H, IN_DIM)),    # w0
                invariant((H, 1)),         # b0
                invariant((H, H)),         # w1
                invariant((H, 1)),         # b1
                invariant((OUT_DIM, H)),   # w2
                invariant((OUT_DIM, 1)),   # b2
            ],
            out_specs=pl.BlockSpec((OUT_DIM, tb), lambda i: (0, i)),
        ),
        compiler_params=pltpu.CompilerParams(
            dimension_semantics=("parallel",)),
    )(s_t, w0, b0, w1, b1, w2, b2)

    return out_t[:, :B].T  # (B, 1)


def init_params(key, hidden_dim=HIDDEN_DIM):
    """Deterministic PyTorch-style (uniform +-1/sqrt(fan_in)) Linear init.

    Weights in PyTorch layout (out_features, in_features); biases as (out_features, 1).
    """
    def linear(key, fan_in, fan_out):
        kw, kb = jax.random.split(key)
        bound = 1.0 / jnp.sqrt(jnp.asarray(fan_in, jnp.float32))
        w = jax.random.uniform(kw, (fan_out, fan_in), jnp.float32, -bound, bound)
        b = jax.random.uniform(kb, (fan_out, 1), jnp.float32, -bound, bound)
        return w, b

    k0, k1, k2 = jax.random.split(key, 3)
    w0, b0 = linear(k0, IN_DIM, hidden_dim)
    w1, b1 = linear(k1, hidden_dim, hidden_dim)
    w2, b2 = linear(k2, hidden_dim, OUT_DIM)
    return (w0, b0, w1, b1, w2, b2)


def _reference(s, params):
    w0, b0, w1, b1, w2, b2 = params
    h = jnp.maximum(s @ w0.T + b0.T, 0.0)
    h = jnp.maximum(h @ w1.T + b1.T, 0.0)
    return h @ w2.T + b2.T


if __name__ == "__main__":
    key = jax.random.PRNGKey(0)
    kp, ks, kz = jax.random.split(key, 3)
    params = init_params(kp)

    # Small demo batch (padded to 128 lanes, single-tile path, grid=(1,)).
    B = 16
    s = jax.random.normal(ks, (B, IN_DIM), jnp.float32)   # state input (B, 2)
    z = jax.random.normal(kz, (B, 8), jnp.float32)        # unused skill latent
    out = jax.block_until_ready(manager_baseline_forward(s, z, params))
    ref = _reference(s, params)
    assert out.shape == (B, OUT_DIM)
    assert jnp.allclose(out, ref, atol=1e-5, rtol=1e-5)

    # Larger batch exercising the tiled (grid>1) lane-aligned path.
    B2 = 2048
    s2 = jax.random.normal(jax.random.fold_in(ks, 1), (B2, IN_DIM), jnp.float32)
    out2 = jax.block_until_ready(manager_baseline_forward(s2, None, params))
    ref2 = _reference(s2, params)
    assert out2.shape == (B2, OUT_DIM)
    assert jnp.allclose(out2, ref2, atol=1e-5, rtol=1e-5)

    # Ragged batch exercising the lane-padding path.
    B3 = 300
    s3 = jax.random.normal(jax.random.fold_in(ks, 2), (B3, IN_DIM), jnp.float32)
    out3 = jax.block_until_ready(manager_baseline_forward(s3, None, params))
    ref3 = _reference(s3, params)
    assert out3.shape == (B3, OUT_DIM)
    assert jnp.allclose(out3, ref3, atol=1e-5, rtol=1e-5)

    print("KERNEL_OK")
</pallas_src>

<mosaic_0001>
module attributes {stable_mosaic.version = 11 : i64} {
  func.func @_mlp_kernel(%arg0: i32, %arg1: memref<2x128xf32, #tpu.memory_space<vmem>>, %arg2: memref<32x2xf32, #tpu.memory_space<vmem>>, %arg3: memref<32x1xf32, #tpu.memory_space<vmem>>, %arg4: memref<32x32xf32, #tpu.memory_space<vmem>>, %arg5: memref<32x1xf32, #tpu.memory_space<vmem>>, %arg6: memref<1x32xf32, #tpu.memory_space<vmem>>, %arg7: memref<1x1xf32, #tpu.memory_space<vmem>>, %arg8: memref<1x128xf32, #tpu.memory_space<vmem>>) attributes {dimension_semantics = [#tpu.dimension_semantics<parallel>], iteration_bounds = array<i64: 1>, scalar_prefetch = 0 : i64, scratch_operands = 0 : i64, tpu.core_type = #tpu.core_type<tc>, window_params = [{transform_indices = @transform_0, window_bounds = array<i64: 2, 128>}, {pipeline_mode = #tpu.pipeline_mode<synchronous>, transform_indices = @transform_1, window_bounds = array<i64: 32, 2>}, {pipeline_mode = #tpu.pipeline_mode<synchronous>, transform_indices = @transform_2, window_bounds = array<i64: 32, 1>}, {pipeline_mode = #tpu.pipeline_mode<synchronous>, transform_indices = @transform_3, window_bounds = array<i64: 32, 32>}, {pipeline_mode = #tpu.pipeline_mode<synchronous>, transform_indices = @transform_4, window_bounds = array<i64: 32, 1>}, {pipeline_mode = #tpu.pipeline_mode<synchronous>, transform_indices = @transform_5, window_bounds = array<i64: 1, 32>}, {pipeline_mode = #tpu.pipeline_mode<synchronous>, transform_indices = @transform_6, window_bounds = array<i64: 1, 1>}, {transform_indices = @transform_7, window_bounds = array<i64: 1, 128>}]} {
    %c0 = arith.constant 0 : index
    %c0_0 = arith.constant 0 : index
    %0 = vector.load %arg1[%c0, %c0_0] : memref<2x128xf32, #tpu.memory_space<vmem>>, vector<2x128xf32>
    %c0_1 = arith.constant 0 : index
    %c0_2 = arith.constant 0 : index
    %1 = vector.load %arg2[%c0_1, %c0_2] : memref<32x2xf32, #tpu.memory_space<vmem>>, vector<32x1xf32>
    %2 = vector.extract_strided_slice %0 {offsets = [0, 0], sizes = [1, 128], strides = [1, 1]} : vector<2x128xf32> to vector<1x128xf32>
    %3 = vector.broadcast %1 : vector<32x1xf32> to vector<32x128xf32>
    %4 = vector.broadcast %2 : vector<1x128xf32> to vector<32x128xf32>
    %5 = arith.mulf %3, %4 : vector<32x128xf32>
    %c0_3 = arith.constant 0 : index
    %c1 = arith.constant 1 : index
    %6 = vector.load %arg2[%c0_3, %c1] : memref<32x2xf32, #tpu.memory_space<vmem>>, vector<32x1xf32>
    %7 = vector.extract_strided_slice %0 {offsets = [1, 0], sizes = [1, 128], strides = [1, 1]} : vector<2x128xf32> to vector<1x128xf32>
    %8 = vector.broadcast %6 : vector<32x1xf32> to vector<32x128xf32>
    %9 = vector.broadcast %7 : vector<1x128xf32> to vector<32x128xf32>
    %10 = arith.mulf %8, %9 : vector<32x128xf32>
    %11 = arith.addf %5, %10 : vector<32x128xf32>
    %c0_4 = arith.constant 0 : index
    %c0_5 = arith.constant 0 : index
    %12 = vector.load %arg3[%c0_4, %c0_5] : memref<32x1xf32, #tpu.memory_space<vmem>>, vector<32x1xf32>
    %13 = vector.broadcast %12 : vector<32x1xf32> to vector<32x128xf32>
    %14 = arith.addf %11, %13 : vector<32x128xf32>
    %cst = arith.constant 0.000000e+00 : f32
    %15 = vector.broadcast %cst : f32 to vector<32x128xf32>
    %16 = arith.maximumf %14, %15 : vector<32x128xf32>
    %c0_6 = arith.constant 0 : index
    %c0_7 = arith.constant 0 : index
    %17 = vector.load %arg4[%c0_6, %c0_7] : memref<32x32xf32, #tpu.memory_space<vmem>>, vector<32x32xf32>
    %cst_8 = arith.constant dense<0.000000e+00> : vector<32x128xf32>
    %18 = tpu.matmul %17, %16, %cst_8 {dimension_numbers = #tpu.dot_dimension_numbers<[1], [0], [0], [1], [0, 0, 1, 1], [], []>} : vector<32x32xf32>, vector<32x128xf32>, vector<32x128xf32> -> vector<32x128xf32>
    %c0_9 = arith.constant 0 : index
    %c0_10 = arith.constant 0 : index
    %19 = vector.load %arg5[%c0_9, %c0_10] : memref<32x1xf32, #tpu.memory_space<vmem>>, vector<32x1xf32>
    %20 = vector.broadcast %19 : vector<32x1xf32> to vector<32x128xf32>
    %21 = arith.addf %18, %20 : vector<32x128xf32>
    %cst_11 = arith.constant 0.000000e+00 : f32
    %22 = vector.broadcast %cst_11 : f32 to vector<32x128xf32>
    %23 = arith.maximumf %21, %22 : vector<32x128xf32>
    %c0_12 = arith.constant 0 : index
    %c0_13 = arith.constant 0 : index
    %24 = vector.load %arg6[%c0_12, %c0_13] : memref<1x32xf32, #tpu.memory_space<vmem>>, vector<1x32xf32>
    %cst_14 = arith.constant dense<0.000000e+00> : vector<1x128xf32>
    %25 = tpu.matmul %24, %23, %cst_14 {dimension_numbers = #tpu.dot_dimension_numbers<[1], [0], [0], [1], [0, 0, 1, 1], [], []>} : vector<1x32xf32>, vector<32x128xf32>, vector<1x128xf32> -> vector<1x128xf32>
    %c0_15 = arith.constant 0 : index
    %c0_16 = arith.constant 0 : index
    %26 = vector.load %arg7[%c0_15, %c0_16] : memref<1x1xf32, #tpu.memory_space<vmem>>, vector<1x1xf32>
    %27 = vector.broadcast %26 : vector<1x1xf32> to vector<1x128xf32>
    %28 = arith.addf %25, %27 : vector<1x128xf32>
    %c0_17 = arith.constant 0 : index
    %c0_18 = arith.constant 0 : index
    %29 = vector.load %arg8[%c0_17, %c0_18] : memref<1x128xf32, #tpu.memory_space<vmem>>, vector<1x128xf32>
    tpu.vector_store %arg8[%c0_17, %c0_18], %28 {strides = array<i32>} : memref<1x128xf32, #tpu.memory_space<vmem>>, vector<1x128xf32>,
    return
  }
  func.func @transform_0(%arg0: i32) -> (i32, i32) {
    %c0_i32 = arith.constant 0 : i32
    %c0_i32_0 = arith.constant 0 : i32
    return %c0_i32, %arg0 : i32, i32
  }
  func.func @transform_1(%arg0: i32) -> (i32, i32) {
    %c0_i32 = arith.constant 0 : i32
    %c0_i32_0 = arith.constant 0 : i32
    %c0_i32_1 = arith.constant 0 : i32
    return %c0_i32, %c0_i32_0 : i32, i32
  }
  func.func @transform_2(%arg0: i32) -> (i32, i32) {
    %c0_i32 = arith.constant 0 : i32
    %c0_i32_0 = arith.constant 0 : i32
    %c0_i32_1 = arith.constant 0 : i32
    return %c0_i32, %c0_i32_0 : i32, i32
  }
  func.func @transform_3(%arg0: i32) -> (i32, i32) {
    %c0_i32 = arith.constant 0 : i32
    %c0_i32_0 = arith.constant 0 : i32
    %c0_i32_1 = arith.constant 0 : i32
    return %c0_i32, %c0_i32_0 : i32, i32
  }
  func.func @transform_4(%arg0: i32) -> (i32, i32) {
    %c0_i32 = arith.constant 0 : i32
    %c0_i32_0 = arith.constant 0 : i32
    %c0_i32_1 = arith.constant 0 : i32
    return %c0_i32, %c0_i32_0 : i32, i32
  }
  func.func @transform_5(%arg0: i32) -> (i32, i32) {
    %c0_i32 = arith.constant 0 : i32
    %c0_i32_0 = arith.constant 0 : i32
    %c0_i32_1 = arith.constant 0 : i32
    return %c0_i32, %c0_i32_0 : i32, i32
  }
  func.func @transform_6(%arg0: i32) -> (i32, i32) {
    %c0_i32 = arith.constant 0 : i32
    %c0_i32_0 = arith.constant 0 : i32
    %c0_i32_1 = arith.constant 0 : i32
    return %c0_i32, %c0_i32_0 : i32, i32
  }
  func.func @transform_7(%arg0: i32) -> (i32, i32) {
    %c0_i32 = arith.constant 0 : i32
    %c0_i32_0 = arith.constant 0 : i32
    return %c0_i32, %arg0 : i32, i32
  }
}

</mosaic_0001>

<llo_original>
// kernel: tpu_custom_call.1
$region0: #{tpu_custom_call.1}
  #allocation0 [shape = 'u32[]', space=smem, size = 0x4, offset = 0x4, fixed_abs, tag = 'smem constant byte address 0x4 - core index']
  #allocation1 [shape = 'u32[72,128]{1,0:T(1,128)}', space=vmem, size = 0x9000, scoped, tag = 'internal scratch']
  #allocation2 [shape = 'f32[1,1]{1,0:T(1,128)S(1)}', space=vmem, size = 0x200, scoped, tag = 'scoped memory for tpu_custom_call.1']
  %s0 = inlined_call_operand.vmem [shape: f32[2,128], index: 0, kind: input, shape index: {}]
  %s1 = inlined_call_operand.vmem [shape: f32[32,2], index: 1, kind: input, shape index: {}]
  %s2 = inlined_call_operand.vmem [shape: f32[32,1], index: 2, kind: input, shape index: {}]
  %s3 = inlined_call_operand.vmem [shape: f32[32,32], index: 3, kind: input, shape index: {}]
  %s4 = inlined_call_operand.vmem [shape: f32[32,1], index: 4, kind: input, shape index: {}]
  %s5 = inlined_call_operand.vmem [shape: f32[1,32], index: 5, kind: input, shape index: {}]
  %s6 = inlined_call_operand.<no memory space> [shape: f32[1,1], index: 6, kind: input, shape index: {}]
  %s7 = inlined_call_operand.hbm [shape: f32[1,128], index: 7, kind: output, shape index: {}]
  %s8 = sld [smem:[#allocation0]]
  $region38: #{tpu_custom_call.1} parent=0
    _
  %s10 = ssub.s32 1, %s8
  %s11 = scalar_select 0, %s10, %s8
  %v12 = vstv %s6
  %13 = vst [vmem:[#allocation2] sm:$0x1] %v12
  $region1: #{tpu_custom_call.1} parent=0
    #allocation3 [shape = 'u8[512]{0}', space=vmem, size = 0x400, scoped, tag = 'output window, operand 0, single buffered']
    #allocation4 [shape = 's32[1]{0}', space=sflag, size = 0x4, scoped, tag = 'scoped memory for tpu_custom_call.1']
    %14 = vsyncpa [#allocation4], 0
    // Predicated region
    $region2: #{tpu_custom_call.1} parent=1 // pred_check
      _
    $region3: #{tpu_custom_call.1} parent=1 // pred_check_branch
      %16 = sbr.rel (0) target = $region5
    $region4: #{tpu_custom_call.1} parent=1 // pred_region
      _
    $region5: #{tpu_custom_call.1} parent=1 // pred_fallthru
      _
    // Predicated region
    $region6: #{tpu_custom_call.1} parent=1 // pred_check
      _
    $region7: #{tpu_custom_call.1} parent=1 // pred_check_branch
      %18 = sbr.rel (0) target = $region9
    $region8: #{tpu_custom_call.1} parent=1 // pred_region
      _
    $region9: #{tpu_custom_call.1} parent=1 // pred_fallthru
      _
    // Predicated region
    $region10: #{tpu_custom_call.1} parent=1 // pred_check
      _
    $region11: #{tpu_custom_call.1} parent=1 // pred_check_branch
      %20 = sbr.rel (0) target = $region13
    $region12: #{tpu_custom_call.1} parent=1 // pred_region
      _
    $region13: #{tpu_custom_call.1} parent=1 // pred_fallthru
      _
    // Predicated region
    $region14: #{tpu_custom_call.1} parent=1 // pred_check
      _
    $region15: #{tpu_custom_call.1} parent=1 // pred_check_branch
      %22 = sbr.rel (0) target = $region17
    $region16: #{tpu_custom_call.1} parent=1 // pred_region
      _
    $region17: #{tpu_custom_call.1} parent=1 // pred_fallthru
      _
    // Predicated region
    $region18: #{tpu_custom_call.1} parent=1 // pred_check
      _
    $region19: #{tpu_custom_call.1} parent=1 // pred_check_branch
      %24 = sbr.rel (0) target = $region21
    $region20: #{tpu_custom_call.1} parent=1 // pred_region
      _
    $region21: #{tpu_custom_call.1} parent=1 // pred_fallthru
      _
    // Predicated region
    $region22: #{tpu_custom_call.1} parent=1 // pred_check
      _
    $region23: #{tpu_custom_call.1} parent=1 // pred_check_branch
      %26 = sbr.rel (0) target = $region25
    $region24: #{tpu_custom_call.1} parent=1 // pred_region
      _
    $region25: #{tpu_custom_call.1} parent=1 // pred_fallthru
      _
    // Predicated region
    $region26: #{tpu_custom_call.1} parent=1 // pred_check
      _
    $region27: #{tpu_custom_call.1} parent=1 // pred_check_branch
      %28 = sbr.rel (0) target = $region29
    $region28: #{tpu_custom_call.1} parent=1 // pred_region
      _
    $region29: #{tpu_custom_call.1} parent=1 // pred_fallthru
      _
    %v29 = vld [vmem:[%s0] sm:$0x3]
    %v30 = vld [vmem:[%s1] sm:$0xff]
    %v31 = vld [vmem:[%s1 + $0x8] sm:$0xff]
    %v32 = vld [vmem:[%s1 + $0x10] sm:$0xff]
    %v33 = vld [vmem:[%s1 + $0x18] sm:$0xff]
    %35 = vset.pattern.permute.xlu0 0
    %36 = vperm.xlu0 %35, %v30
    %v37 = vpop.permute.xlu0 %36
    %40 = vset.pattern.permute.xlu0 0
    %41 = vperm.xlu0 %40, %v31
    %v42 = vpop.permute.xlu0 %41
    %45 = vset.pattern.permute.xlu0 0
    %46 = vperm.xlu0 %45, %v32
    %v47 = vpop.permute.xlu0 %46
    %50 = vset.pattern.permute.xlu0 0
    %51 = vperm.xlu0 %50, %v33
    %v52 = vpop.permute.xlu0 %51
    %v54 = vperm.slane %v29, 0
    %v55 = vmul.f32 %v37, %v54
    %v56 = vmul.f32 %v42, %v54
    %v57 = vmul.f32 %v47, %v54
    %v58 = vmul.f32 %v52, %v54
    %59 = vset.pattern.permute.xlu0 1
    %60 = vperm.xlu0 %59, %v30
    %v61 = vpop.permute.xlu0 %60
    %63 = vset.pattern.permute.xlu0 1
    %64 = vperm.xlu0 %63, %v31
    %v65 = vpop.permute.xlu0 %64
    %67 = vset.pattern.permute.xlu0 1
    %68 = vperm.xlu0 %67, %v32
    %v69 = vpop.permute.xlu0 %68
    %71 = vset.pattern.permute.xlu0 1
    %72 = vperm.xlu0 %71, %v33
    %v73 = vpop.permute.xlu0 %72
    %v75 = vperm.slane %v29, 1
    %v76 = vmul.f32 %v61, %v75
    %v77 = vmul.f32 %v65, %v75
    %v78 = vmul.f32 %v69, %v75
    %v79 = vmul.f32 %v73, %v75
    %v80 = vadd.f32 %v55, %v76
    %v81 = vadd.f32 %v56, %v77
    %v82 = vadd.f32 %v57, %v78
    %v83 = vadd.f32 %v58, %v79
    %v84 = vld [vmem:[%s2] sm:$0xff]
    %v85 = vld [vmem:[%s2 + $0x8] sm:$0xff]
    %v86 = vld [vmem:[%s2 + $0x10] sm:$0xff]
    %v87 = vld [vmem:[%s2 + $0x18] sm:$0xff]
    %89 = vset.pattern.permute.xlu0 0
    %90 = vperm.xlu0 %89, %v84
    %v91 = vpop.permute.xlu0 %90
    %94 = vset.pattern.permute.xlu0 0
    %95 = vperm.xlu0 %94, %v85
    %v96 = vpop.permute.xlu0 %95
    %99 = vset.pattern.permute.xlu0 0
    %100 = vperm.xlu0 %99, %v86
    %v101 = vpop.permute.xlu0 %100
    %104 = vset.pattern.permute.xlu0 0
    %105 = vperm.xlu0 %104, %v87
    %v106 = vpop.permute.xlu0 %105
    %v108 = vadd.f32 %v80, %v91
    %v109 = vadd.f32 %v81, %v96
    %v110 = vadd.f32 %v82, %v101
    %v111 = vadd.f32 %v83, %v106
    %v112 = vmax.f32 %v108, 0.0
    %v113 = vmax.f32 %v109, 0.0
    %v114 = vmax.f32 %v110, 0.0
    %v115 = vmax.f32 %v111, 0.0
    %v116 = vld [vmem:[%s3] sm:$0xff]
    %v117 = vld [vmem:[%s3 + $0x8] sm:$0xff]
    %v118 = vld [vmem:[%s3 + $0x10] sm:$0xff]
    %v119 = vld [vmem:[%s3 + $0x18] sm:$0xff]
    %v120 = vld [vmem:[%s4] sm:$0xff]
    %v121 = vld [vmem:[%s4 + $0x8] sm:$0xff]
    %v122 = vld [vmem:[%s4 + $0x10] sm:$0xff]
    %v123 = vld [vmem:[%s4 + $0x18] sm:$0xff]
    %125 = vset.pattern.permute.xlu0 0
    %126 = vperm.xlu0 %125, %v120
    %v127 = vpop.permute.xlu0 %126
    %130 = vset.pattern.permute.xlu0 0
    %131 = vperm.xlu0 %130, %v121
    %v132 = vpop.permute.xlu0 %131
    %135 = vset.pattern.permute.xlu0 0
    %136 = vperm.xlu0 %135, %v122
    %v137 = vpop.permute.xlu0 %136
    %140 = vset.pattern.permute.xlu0 0
    %141 = vperm.xlu0 %140, %v123
    %v142 = vpop.permute.xlu0 %141
    %vm144 = vcmask 261120
    %v146 = vsel %vm144, %v116, 0
    %v149 = vsel %vm144, %v117, 0
    %v152 = vsel %vm144, %v118, 0
    %v155 = vsel %vm144, %v119, 0
    %157 = vmatpush.msra.mxu0 0.0
    %158 = vmatpush.msra.mxu0 0.0
    %159 = vmatpush.msra.mxu0 0.0
    %160 = vmatpush.msra.mxu0 0.0
    %161 = vmatpush.msra.mxu0 0.0
    %162 = vmatpush.msra.mxu0 0.0
    %163 = vmatpush.msra.mxu0 0.0
    %164 = vmatpush.msra.mxu0 0.0
    %165 = vmatpush.msra.mxu0 0.0
    %166 = vmatpush.msra.mxu0 0.0
    %167 = vmatpush.msra.mxu0 0.0
    %168 = vmatpush.msra.mxu0 0.0
    %169 = vmatpush.msra.mxu0 %v115
    %170 = vmatpush.msra.mxu0 %v114
    %171 = vmatpush.msra.mxu0 %v113
    %172 = vmatpush.msra.mxu0 %v112
    %173 = vmatmul.f32.gmra.mxu0 %v146
    %v174 = vpop.f32.mrf.mxu0
    %v175 = vadd.f32 %v127, %v174
    %176 = vmatmul.f32.gmra.mxu0 %v149
    %v177 = vpop.f32.mrf.mxu0
    %v178 = vadd.f32 %v132, %v177
    %179 = vmatmul.f32.gmra.mxu0 %v152
    %v180 = vpop.f32.mrf.mxu0
    %v181 = vadd.f32 %v137, %v180
    %182 = vmatmul.f32.gmra.mxu0 %v155
    %v183 = vpop.f32.mrf.mxu0
    %v184 = vadd.f32 %v142, %v183
    %185 = vdwg.mxu0
    %v186 = vmax.f32 %v175, 0.0
    %v187 = vmax.f32 %v178, 0.0
    %v188 = vmax.f32 %v181, 0.0
    %v189 = vmax.f32 %v184, 0.0
    %v190 = vld [vmem:[%s5] sm:$0x1]
    %v191 = vld [vmem:[#allocation2] sm:$0x1]
    %193 = vset.pattern.permute.xlu0 0
    %194 = vperm.xlu0 %193, %v191
    %v195 = vpop.permute.xlu0 %194
    %v197 = vperm.slane %v195, 0
    %v199 = vsel %vm144, %v190, 0
    %201 = vmatpush.msra.mxu0 0.0
    %202 = vmatpush.msra.mxu0 0.0
    %203 = vmatpush.msra.mxu0 0.0
    %204 = vmatpush.msra.mxu0 0.0
    %205 = vmatpush.msra.mxu0 0.0
    %206 = vmatpush.msra.mxu0 0.0
    %207 = vmatpush.msra.mxu0 0.0
    %208 = vmatpush.msra.mxu0 0.0
    %209 = vmatpush.msra.mxu0 0.0
    %210 = vmatpush.msra.mxu0 0.0
    %211 = vmatpush.msra.mxu0 0.0
    %212 = vmatpush.msra.mxu0 0.0
    %213 = vmatpush.msra.mxu0 %v189
    %214 = vmatpush.msra.mxu0 %v188
    %215 = vmatpush.msra.mxu0 %v187
    %216 = vmatpush.msra.mxu0 %v186
    %217 = vmatmul.f32.gmra.mxu0 %v199
    %v218 = vpop.f32.mrf.mxu0
    %v219 = vadd.f32 %v197, %v218
    %220 = vdwg.mxu0
    %221 = vst [vmem:[#allocation3] sm:$0x1] %v219
    // Predicated region
    $region30: #{tpu_custom_call.1} parent=1 // pred_check
      _
    $region31: #{tpu_custom_call.1} parent=1 // pred_check_branch
      %223 = sbr.rel (0) target = $region33
    $region32: #{tpu_custom_call.1} parent=1 // pred_region
      %225 = vsyncadd [#allocation4], 0
      %s227 = sshll.u32 [#allocation3], 4
      %s228 = int_to_ptr.vmem [resolvable:$true] %s227
      %s229 = sshll.u32 %s7, 4
      %s230 = int_to_ptr.hbm [resolvable:$true] %s229
      %232 = dma.vmem_to_hbm [thread:$0]  %s228, 16, %s230, [#allocation4]
    $region33: #{tpu_custom_call.1} parent=1 // pred_fallthru
      _
    // Predicated region
    $region34: #{tpu_custom_call.1} parent=1 // pred_check
      _
    $region35: #{tpu_custom_call.1} parent=1 // pred_check_branch
      %234 = sbr.rel (0) target = $region37
    $region36: #{tpu_custom_call.1} parent=1 // pred_region
      %236 = dma.done [#allocation4], 16
    $region37: #{tpu_custom_call.1} parent=1 // pred_fallthru
      _
    %237 = vsyncpa [#allocation4], 1

</llo_original>
